<compile_context>
chip_gen: v6e
topology: v6e:2x2x1
jax: 0.10.0
libtpu: 0.0.40
codegen_flags: <defaults>
</compile_context>

<pallas_src>
import math

import numpy as np
import jax
import jax.numpy as jnp
from jax.experimental import pallas as pl
from jax.experimental.pallas import tpu as pltpu

_BN_EPS = 1e-5
_LANE = 128


def _round_up(x, m):
    return ((x + m - 1) // m) * m


# ----------------------------------------------------------------------------
# Parameter construction (matches the PyTorch module's __init__).
# ----------------------------------------------------------------------------
def init_fcnn_raw(key, config, input_dim):
    """Raw per-layer params with PyTorch layouts/initializers."""
    raw = []
    d_in = input_dim
    for layer in config:
        d_out = layer["dim"]
        key, kw, kb = jax.random.split(key, 3)
        # Xavier uniform for the weight (nn.init.xavier_uniform_).
        bound_w = math.sqrt(6.0 / (d_in + d_out))
        w = jax.random.uniform(kw, (d_out, d_in), jnp.float32, -bound_w, bound_w)
        # PyTorch Linear default bias init: U(-1/sqrt(fan_in), 1/sqrt(fan_in)).
        bound_b = 1.0 / math.sqrt(d_in)
        b = jax.random.uniform(kb, (d_out,), jnp.float32, -bound_b, bound_b)

        entry = {"w": w, "b": b, "batchnorm": bool(layer["batchnorm"])}
        if layer["batchnorm"]:
            # Fresh BatchNorm1d: gamma=1, beta=0, running_mean=0, running_var=1.
            entry["gamma"] = jnp.ones((d_out,), jnp.float32)
            entry["beta"] = jnp.zeros((d_out,), jnp.float32)
            entry["running_mean"] = jnp.zeros((d_out,), jnp.float32)
            entry["running_var"] = jnp.ones((d_out,), jnp.float32)
        raw.append(entry)
        d_in = d_out
    return raw


# ----------------------------------------------------------------------------
# One-time parameter preparation (host-side NumPy; no tracers, no device sync
# inside a jit).
# ----------------------------------------------------------------------------
def prepare_params(raw_params, *, compute_dtype=jnp.float32):
    """Fold BN, pad feature dims to 128 lanes, transpose W to (Din_pad, Dout_pad),
    pack bias/scale/shift rows into a single (3, total) operand."""
    din = int(raw_params[0]["w"].shape[1])
    d_in_pad = _round_up(din, _LANE)

    weights, bias_rows, scale_rows, shift_rows = [], [], [], []
    modes, layer_dims = [], []

    for p in raw_params:
        w = np.asarray(p["w"], np.float32)          # (Dout, Din)
        b = np.asarray(p["b"], np.float32)          # (Dout,)
        d_out = int(w.shape[0])
        d_out_pad = _round_up(d_out, _LANE)

        scale = np.ones((d_out,), np.float32)
        shift = np.zeros((d_out,), np.float32)
        mode = "plain"
        if p["batchnorm"]:
            gamma = np.asarray(p["gamma"], np.float32)
            beta = np.asarray(p["beta"], np.float32)
            rmean = np.asarray(p["running_mean"], np.float32)
            rvar = np.asarray(p["running_var"], np.float32)
            s = gamma / np.sqrt(rvar + _BN_EPS)
            sh = beta - rmean * s
            if np.all(s > 0.0):                     # static host-side decision
                # relu(z) * s == relu(z * s) for s > 0 -> fold scale into W, b.
                w = w * s[:, None]
                b = b * s
                shift = sh
                mode = "shift"
            else:
                # Trained gamma <= 0 somewhere: keep the explicit affine.
                scale = s
                shift = sh
                mode = "affine"

        # Zero-pad W/b/shift; pad scale with 1.0 (padded lanes carry exact 0s).
        w_pad = np.zeros((d_out_pad, d_in_pad), np.float32)
        w_pad[:d_out, :w.shape[1]] = w
        b_pad = np.zeros((d_out_pad,), np.float32); b_pad[:d_out] = b
        s_pad = np.ones((d_out_pad,), np.float32);  s_pad[:d_out] = scale
        h_pad = np.zeros((d_out_pad,), np.float32); h_pad[:d_out] = shift

        weights.append(jnp.asarray(w_pad.T, compute_dtype))   # (Din_pad, Dout_pad)
        bias_rows.append(b_pad); scale_rows.append(s_pad); shift_rows.append(h_pad)
        modes.append(mode)
        layer_dims.append((d_in_pad, d_out_pad))
        d_in_pad = d_out_pad

    # Pack bias / scale / shift into a single (3, total) f32 operand.
    offs, off = [], 0
    for (_, dpad) in layer_dims:
        offs.append(off); off += dpad
    total = off
    vec = np.zeros((3, total), np.float32)
    for i, (o, (_, dpad)) in enumerate(zip(offs, layer_dims)):
        vec[0, o:o + dpad] = bias_rows[i]
        vec[1, o:o + dpad] = scale_rows[i]
        vec[2, o:o + dpad] = shift_rows[i]

    return {
        "weights": weights,
        "vec": jnp.asarray(vec, jnp.float32),
        "meta": tuple((offs[i], layer_dims[i][1], modes[i]) for i in range(len(modes))),
        "layer_dims": tuple(layer_dims),
        "din": din,
        "din_pad": _round_up(din, _LANE),
        "dout": int(raw_params[-1]["w"].shape[0]),
        "dout_pad": layer_dims[-1][1],
        "compute_dtype": compute_dtype,
    }


# ----------------------------------------------------------------------------
# Fused Pallas kernel: the whole layer stack in one call.
# ----------------------------------------------------------------------------
def _make_fused_kernel(meta, compute_dtype, n_layers):
    """meta: tuple of (vec_offset, dout_pad, mode); all static per config."""

    def kernel(*refs):
        x_ref = refs[0]
        w_refs = refs[1:1 + n_layers]
        vec_ref = refs[1 + n_layers]
        o_ref = refs[2 + n_layers]

        h = x_ref[...].astype(jnp.float32)
        for (off, dpad, mode), w_ref in zip(meta, w_refs):
            z = jnp.dot(h.astype(compute_dtype), w_ref[...],
                        preferred_element_type=jnp.float32)
            z = z + vec_ref[0:1, off:off + dpad]        # bias (f32)
            h = jnp.maximum(z, 0.0)                     # ReLU; Dropout = identity (eval)
            if mode == "affine":
                h = h * vec_ref[1:2, off:off + dpad]    # explicit BN scale fallback
            if mode != "plain":
                h = h + vec_ref[2:3, off:off + dpad]    # BN shift
        o_ref[...] = h.astype(o_ref.dtype)

    return kernel


def _tpu_vmem_capacity():
    try:
        return int(pltpu.get_tpu_info().vmem_capacity_bytes)
    except Exception:
        return 64 << 20        # conservative fallback (v7x per-TC)


def fcnn_forward(prepared, x, *, batch_tile="auto"):
    """INPUT: (BATCH, DIM) -> OUTPUT: (BATCH, last_layer_dim). Eval-mode forward.

    One fused pallas_call; weights fully resident in VMEM. Small batches run
    gridless; large batches tile the batch axis ('parallel' -> shards across
    v7x's two TensorCores) while weights stay single-buffered full-VMEM operands.
    """
    x = jnp.asarray(x, jnp.float32)
    B, din = x.shape
    assert din == prepared["din"]
    din_pad = prepared["din_pad"]
    dout_pad = prepared["dout_pad"]
    dout = prepared["dout"]
    compute_dtype = prepared["compute_dtype"]
    weights = prepared["weights"]
    vec = prepared["vec"]
    meta = prepared["meta"]

    if din_pad != din:
        x = jnp.pad(x, ((0, 0), (0, din_pad - din)))   # lane-dense, zero-padded

    weight_bytes = sum(int(w.size) * w.dtype.itemsize for w in weights)
    weight_bytes += int(vec.size) * vec.dtype.itemsize

    vmem_cap = _tpu_vmem_capacity()
    if weight_bytes > int(vmem_cap * 0.6):
        # TODO(synk): weight-streaming fallback (K/N-tiled grid / emit_pipeline
        # over layer chunks) for stacks larger than the resident-VMEM budget.
        raise NotImplementedError("weight stack exceeds resident VMEM budget")

    widest = max(max(d for pair in prepared["layer_dims"] for d in pair), din_pad)

    def act_bytes(rows):
        # double-buffered input tile + output tile + f32 intermediates (headroom).
        return rows * (2 * din_pad * 4 + 2 * dout_pad * 4 + 2 * widest * 4)

    sublane_mult = 16 if np.dtype(compute_dtype) == np.dtype(jnp.bfloat16) else 8
    if batch_tile == "auto":
        budget = int(vmem_cap * 0.6) - weight_bytes
        batch_tile = sublane_mult
        for cand in (1024, 512, 384, 256, 128, 64, 32, 16, 8):
            if cand % sublane_mult == 0 and act_bytes(cand) <= budget:
                batch_tile = cand
                break

    n_layers = len(weights)
    kernel = _make_fused_kernel(meta, compute_dtype, n_layers)
    inputs = [x] + list(weights) + [vec]
    out_shape = jax.ShapeDtypeStruct((B, dout_pad), jnp.float32)

    flops = 2 * B * sum(di * do for (di, do) in prepared["layer_dims"])
    bytes_accessed = weight_bytes + B * (din_pad + dout_pad) * 4
    cost = pl.CostEstimate(flops=flops, transcendentals=0,
                           bytes_accessed=bytes_accessed)

    vmem_spec = pl.BlockSpec(memory_space=pltpu.MemorySpace.VMEM)

    if batch_tile is None or B <= batch_tile:
        # Gridless: every operand is a full-array VMEM block.
        needed = weight_bytes + act_bytes(B)
        limit = int(min(vmem_cap * 0.9, max(needed * 2, 32 << 20)))
        out = pl.pallas_call(
            kernel,
            out_shape=out_shape,
            in_specs=[vmem_spec] * len(inputs),
            out_specs=vmem_spec,
            compiler_params=pltpu.CompilerParams(vmem_limit_bytes=limit),
            cost_estimate=cost,
        )(*inputs)
    else:
        tb = int(batch_tile)
        assert tb % sublane_mult == 0, "batch tile must be a sublane multiple"
        grid = (pl.cdiv(B, tb),)
        in_specs = [pl.BlockSpec((tb, din_pad), lambda i: (i, 0))]
        # Weights / packed vec: unblocked full-array VMEM operands -> loaded
        # once, single-buffered (no per-step DMA descriptors, half the VMEM).
        in_specs += [vmem_spec] * (len(inputs) - 1)
        out_specs = pl.BlockSpec((tb, dout_pad), lambda i: (i, 0))
        needed = weight_bytes + act_bytes(tb)
        limit = int(min(vmem_cap * 0.9, max(needed * 2, 32 << 20)))
        out = pl.pallas_call(
            kernel,
            out_shape=out_shape,
            grid=grid,
            in_specs=in_specs,
            out_specs=out_specs,
            compiler_params=pltpu.CompilerParams(
                dimension_semantics=("parallel",),
                vmem_limit_bytes=limit),
            cost_estimate=cost,
        )(*inputs)

    return out[:, :dout] if dout != dout_pad else out


# ----------------------------------------------------------------------------
# Pure-JAX reference (original Sequential order) for correctness checking.
# ----------------------------------------------------------------------------
def fcnn_reference(raw_params, x):
    h = jnp.asarray(x, jnp.float32)
    for p in raw_params:
        h = jnp.dot(h, p["w"].T, precision=jax.lax.Precision.HIGHEST) + p["b"]
        h = jnp.maximum(h, 0.0)
        # Dropout: identity in eval mode.
        if p["batchnorm"]:
            scale = p["gamma"] / jnp.sqrt(p["running_var"] + _BN_EPS)
            h = (h - p["running_mean"]) * scale + p["beta"]
    return h


if __name__ == "__main__":
    # Small shapes consistent with the module: (BATCH, DIM) input.
    config = [
        {"dim": 64, "dropout": 0.1, "batchnorm": True},
        {"dim": 32, "dropout": 0.0, "batchnorm": False},
    ]
    input_dim = 32

    key = jax.random.PRNGKey(0)
    key, kx, kx2, kx3 = jax.random.split(key, 4)

    raw = init_fcnn_raw(key, config, input_dim)

    # --- f32, small batch: gridless fused kernel (auto path) ---
    params_f32 = prepare_params(raw, compute_dtype=jnp.float32)
    x = jax.random.normal(kx, (8, input_dim), jnp.float32)
    out = jax.block_until_ready(fcnn_forward(params_f32, x))
    ref = fcnn_reference(raw, x)
    assert out.shape == (8, config[-1]["dim"])
    assert bool(jnp.all(jnp.isfinite(out)))
    assert bool(jnp.allclose(out, ref, rtol=1e-4, atol=1e-4))

    # --- batch-tiled path with a ragged last tile (B % tb != 0) ---
    # batch_tile is forced small here only to exercise the grid path at demo
    # sizes; the "auto" default picks the largest tile fitting the VMEM budget.
    x2 = jax.random.normal(kx2, (320, input_dim), jnp.float32)
    out2 = jax.block_until_ready(fcnn_forward(params_f32, x2, batch_tile=128))
    ref2 = fcnn_reference(raw, x2)
    assert out2.shape == (320, config[-1]["dim"])
    assert bool(jnp.allclose(out2, ref2, rtol=1e-4, atol=1e-4))

    # --- bf16 weights/activation operands (f32 MXU accumulation), v6e/v7x ---
    params_bf16 = prepare_params(raw, compute_dtype=jnp.bfloat16)
    x3 = jax.random.normal(kx3, (64, input_dim), jnp.float32)
    out3 = jax.block_until_ready(fcnn_forward(params_bf16, x3))
    ref3 = fcnn_reference(raw, x3)
    assert out3.shape == (64, config[-1]["dim"])
    assert bool(jnp.allclose(out3, ref3, rtol=5e-2, atol=5e-2))

    # --- mixed-sign BN gamma: exercises the explicit-affine fallback path ---
    raw_neg = [dict(p) for p in raw]
    gamma0 = np.asarray(raw_neg[0]["gamma"]).copy()
    gamma0[::3] = -0.5
    raw_neg[0]["gamma"] = jnp.asarray(gamma0)
    params_neg = prepare_params(raw_neg, compute_dtype=jnp.float32)
    out4 = jax.block_until_ready(fcnn_forward(params_neg, x))
    ref4 = fcnn_reference(raw_neg, x)
    assert bool(jnp.allclose(out4, ref4, rtol=1e-4, atol=1e-4))

    print("KERNEL_OK")
</pallas_src>

<mosaic_0001>
module attributes {stable_mosaic.version = 11 : i64} {
  func.func @kernel(%arg0: memref<8x128xf32, #tpu.memory_space<vmem>>, %arg1: memref<128x128xf32, #tpu.memory_space<vmem>>, %arg2: memref<128x128xf32, #tpu.memory_space<vmem>>, %arg3: memref<3x256xf32, #tpu.memory_space<vmem>>, %arg4: memref<8x128xf32, #tpu.memory_space<vmem>>) attributes {dimension_semantics = [], scalar_prefetch = 0 : i64, scratch_operands = 0 : i64, tpu.core_type = #tpu.core_type<tc>} {
    %c0 = arith.constant 0 : index
    %c0_0 = arith.constant 0 : index
    %0 = vector.load %arg0[%c0, %c0_0] : memref<8x128xf32, #tpu.memory_space<vmem>>, vector<8x128xf32>
    %c0_1 = arith.constant 0 : index
    %c0_2 = arith.constant 0 : index
    %1 = vector.load %arg1[%c0_1, %c0_2] : memref<128x128xf32, #tpu.memory_space<vmem>>, vector<128x128xf32>
    %cst = arith.constant dense<0.000000e+00> : vector<8x128xf32>
    %2 = tpu.matmul %0, %1, %cst {dimension_numbers = #tpu.dot_dimension_numbers<[1], [0], [0], [1], [0, 0, 1, 1], [], []>} : vector<8x128xf32>, vector<128x128xf32>, vector<8x128xf32> -> vector<8x128xf32>
    %c0_3 = arith.constant 0 : index
    %c0_4 = arith.constant 0 : index
    %3 = vector.load %arg3[%c0_3, %c0_4] : memref<3x256xf32, #tpu.memory_space<vmem>>, vector<1x128xf32>
    %4 = vector.broadcast %3 : vector<1x128xf32> to vector<8x128xf32>
    %5 = arith.addf %2, %4 : vector<8x128xf32>
    %cst_5 = arith.constant 0.000000e+00 : f32
    %6 = vector.broadcast %cst_5 : f32 to vector<8x128xf32>
    %7 = arith.maximumf %5, %6 : vector<8x128xf32>
    %c2 = arith.constant 2 : index
    %c0_6 = arith.constant 0 : index
    %8 = vector.load %arg3[%c2, %c0_6] : memref<3x256xf32, #tpu.memory_space<vmem>>, vector<1x128xf32>
    %9 = vector.broadcast %8 : vector<1x128xf32> to vector<8x128xf32>
    %10 = arith.addf %7, %9 : vector<8x128xf32>
    %c0_7 = arith.constant 0 : index
    %c0_8 = arith.constant 0 : index
    %11 = vector.load %arg2[%c0_7, %c0_8] : memref<128x128xf32, #tpu.memory_space<vmem>>, vector<128x128xf32>
    %cst_9 = arith.constant dense<0.000000e+00> : vector<8x128xf32>
    %12 = tpu.matmul %10, %11, %cst_9 {dimension_numbers = #tpu.dot_dimension_numbers<[1], [0], [0], [1], [0, 0, 1, 1], [], []>} : vector<8x128xf32>, vector<128x128xf32>, vector<8x128xf32> -> vector<8x128xf32>
    %c0_10 = arith.constant 0 : index
    %c128 = arith.constant 128 : index
    %13 = vector.load %arg3[%c0_10, %c128] : memref<3x256xf32, #tpu.memory_space<vmem>>, vector<1x128xf32>
    %14 = vector.broadcast %13 : vector<1x128xf32> to vector<8x128xf32>
    %15 = arith.addf %12, %14 : vector<8x128xf32>
    %cst_11 = arith.constant 0.000000e+00 : f32
    %16 = vector.broadcast %cst_11 : f32 to vector<8x128xf32>
    %17 = arith.maximumf %15, %16 : vector<8x128xf32>
    %c0_12 = arith.constant 0 : index
    %c0_13 = arith.constant 0 : index
    %18 = vector.load %arg4[%c0_12, %c0_13] : memref<8x128xf32, #tpu.memory_space<vmem>>, vector<8x128xf32>
    tpu.vector_store %arg4[%c0_12, %c0_13], %17 {strides = array<i32>} : memref<8x128xf32, #tpu.memory_space<vmem>>, vector<8x128xf32>,
    return
  }
}

</mosaic_0001>

<llo_original>
// kernel: tpu_custom_call.1
$region0: #{tpu_custom_call.1}
  #allocation0 [shape = 'u32[]', space=smem, size = 0x4, offset = 0x4, fixed_abs, tag = 'smem constant byte address 0x4 - core index']
  #allocation1 [shape = 'u32[144,128]{1,0:T(1,128)}', space=vmem, size = 0x12000, scoped, tag = 'internal scratch']
  %s0 = inlined_call_operand.hbm [shape: f32[8,128], index: 0, kind: input, shape index: {}]
  %s1 = inlined_call_operand.hbm [shape: f32[128,128], index: 1, kind: input, shape index: {}]
  %s2 = inlined_call_operand.hbm [shape: f32[128,128], index: 2, kind: input, shape index: {}]
  %s3 = inlined_call_operand.hbm [shape: f32[3,256], index: 3, kind: input, shape index: {}]
  %s4 = inlined_call_operand.hbm [shape: f32[8,128], index: 4, kind: output, shape index: {}]
  %s5 = sld [smem:[#allocation0]]
  $region42: #{tpu_custom_call.1} parent=0
    _
  %s7 = ssub.s32 1, %s5
  %s8 = scalar_select 0, %s7, %s5
  $region1: #{tpu_custom_call.1} parent=0
    #allocation2 [shape = 'u8[4096]{0}', space=vmem, size = 0x1000, scoped, tag = 'input window, operand 0, single buffered']
    #allocation3 [shape = 's32[1]{0}', space=sflag, size = 0x4, scoped, tag = 'scoped memory for tpu_custom_call.1']
    #allocation4 [shape = 's32[1]{0}', space=sflag, size = 0x4, scoped, tag = 'scoped memory for tpu_custom_call.1']
    #allocation5 [shape = 'u8[65536]{0}', space=vmem, size = 0x10000, scoped, tag = 'input window, operand 1, single buffered']
    #allocation6 [shape = 's32[1]{0}', space=sflag, size = 0x4, scoped, tag = 'scoped memory for tpu_custom_call.1']
    #allocation7 [shape = 'u8[65536]{0}', space=vmem, size = 0x10000, scoped, tag = 'input window, operand 2, single buffered']
    #allocation8 [shape = 'u8[4096]{0}', space=vmem, size = 0x1000, scoped, tag = 'input window, operand 3, single buffered']
    #allocation9 [shape = 's32[1]{0}', space=sflag, size = 0x4, scoped, tag = 'scoped memory for tpu_custom_call.1']
    #allocation10 [shape = 'u8[4096]{0}', space=vmem, size = 0x1000, scoped, tag = 'output window, operand 0, single buffered']
    %9 = vsyncpa [#allocation3], 0
    %10 = vsyncpa [#allocation6], 0
    %11 = vsyncpa [#allocation9], 0
    %12 = vsyncpa [#allocation4], 0
    // Predicated region
    $region2: #{tpu_custom_call.1} parent=1 // pred_check
      _
    $region3: #{tpu_custom_call.1} parent=1 // pred_check_branch
      %14 = sbr.rel (0) target = $region5
    $region4: #{tpu_custom_call.1} parent=1 // pred_region
      %s16 = ssub.s32 128, 128
      %17 = vsyncadd [#allocation3], %s16
      %s19 = sshll.u32 [#allocation2], 4
      %s20 = int_to_ptr.vmem [resolvable:$true] %s19
      %22 = dma.hbm_to_vmem [thread:$0]  %s0, 128, %s20, [#allocation3]
    $region5: #{tpu_custom_call.1} parent=1 // pred_fallthru
      _
    // Predicated region
    $region6: #{tpu_custom_call.1} parent=1 // pred_check
      _
    $region7: #{tpu_custom_call.1} parent=1 // pred_check_branch
      %24 = sbr.rel (0) target = $region9
    $region8: #{tpu_custom_call.1} parent=1 // pred_region
      %s26 = ssub.s32 2048, 2048
      %27 = vsyncadd [#allocation6], %s26
      %s28 = sshll.u32 [#allocation5], 4
      %s29 = int_to_ptr.vmem [resolvable:$true] %s28
      %34 = dma.hbm_to_vmem [thread:$0]  %s1, 2048, %s29, [#allocation6], 128, 128, 8
    $region9: #{tpu_custom_call.1} parent=1 // pred_fallthru
      _
    // Predicated region
    $region10: #{tpu_custom_call.1} parent=1 // pred_check
      _
    $region11: #{tpu_custom_call.1} parent=1 // pred_check_branch
      %36 = sbr.rel (0) target = $region13
    $region12: #{tpu_custom_call.1} parent=1 // pred_region
      %s38 = ssub.s32 2048, 2048
      %39 = vsyncadd [#allocation6], %s38
      %s40 = sshll.u32 [#allocation7], 4
      %s41 = int_to_ptr.vmem [resolvable:$true] %s40
      %46 = dma.hbm_to_vmem [thread:$0]  %s2, 2048, %s41, [#allocation6], 128, 128, 8
    $region13: #{tpu_custom_call.1} parent=1 // pred_fallthru
      _
    // Predicated region
    $region14: #{tpu_custom_call.1} parent=1 // pred_check
      _
    $region15: #{tpu_custom_call.1} parent=1 // pred_check_branch
      %48 = sbr.rel (0) target = $region17
    $region16: #{tpu_custom_call.1} parent=1 // pred_region
      %s50 = ssub.s32 128, 128
      %51 = vsyncadd [#allocation9], %s50
      %s53 = sshll.u32 [#allocation8], 4
      %s54 = int_to_ptr.vmem [resolvable:$true] %s53
      %56 = dma.hbm_to_vmem [thread:$0]  %s3, 128, %s54, [#allocation9]
    $region17: #{tpu_custom_call.1} parent=1 // pred_fallthru
      _
    // Predicated region
    $region18: #{tpu_custom_call.1} parent=1 // pred_check
      _
    $region19: #{tpu_custom_call.1} parent=1 // pred_check_branch
      %58 = sbr.rel (0) target = $region21
    $region20: #{tpu_custom_call.1} parent=1 // pred_region
      %59 = dma.done [#allocation3], 128
    $region21: #{tpu_custom_call.1} parent=1 // pred_fallthru
      _
    // Predicated region
    $region22: #{tpu_custom_call.1} parent=1 // pred_check
      _
    $region23: #{tpu_custom_call.1} parent=1 // pred_check_branch
      %61 = sbr.rel (0) target = $region25
    $region24: #{tpu_custom_call.1} parent=1 // pred_region
      %62 = dma.done [#allocation6], 2048
    $region25: #{tpu_custom_call.1} parent=1 // pred_fallthru
      _
    // Predicated region
    $region26: #{tpu_custom_call.1} parent=1 // pred_check
      _
    $region27: #{tpu_custom_call.1} parent=1 // pred_check_branch
      %64 = sbr.rel (0) target = $region29
    $region28: #{tpu_custom_call.1} parent=1 // pred_region
      %65 = dma.done [#allocation6], 2048
    $region29: #{tpu_custom_call.1} parent=1 // pred_fallthru
      _
    // Predicated region
    $region30: #{tpu_custom_call.1} parent=1 // pred_check
      _
    $region31: #{tpu_custom_call.1} parent=1 // pred_check_branch
      %67 = sbr.rel (0) target = $region33
    $region32: #{tpu_custom_call.1} parent=1 // pred_region
      %68 = dma.done [#allocation9], 128
    $region33: #{tpu_custom_call.1} parent=1 // pred_fallthru
      _
    %v69 = vld [vmem:[#allocation2] sm:$0xff]
    %v70 = vld [vmem:[#allocation5] sm:$0xff]
    %v71 = vld [vmem:[#allocation5 + $0x8] sm:$0xff]
    %v72 = vld [vmem:[#allocation5 + $0x10] sm:$0xff]
    %v73 = vld [vmem:[#allocation5 + $0x18] sm:$0xff]
    %v74 = vld [vmem:[#allocation5 + $0x20] sm:$0xff]
    %v75 = vld [vmem:[#allocation5 + $0x28] sm:$0xff]
    %v76 = vld [vmem:[#allocation5 + $0x30] sm:$0xff]
    %v77 = vld [vmem:[#allocation5 + $0x38] sm:$0xff]
    %v78 = vld [vmem:[#allocation5 + $0x40] sm:$0xff]
    %v79 = vld [vmem:[#allocation5 + $0x48] sm:$0xff]
    %v80 = vld [vmem:[#allocation5 + $0x50] sm:$0xff]
    %v81 = vld [vmem:[#allocation5 + $0x58] sm:$0xff]
    %v82 = vld [vmem:[#allocation5 + $0x60] sm:$0xff]
    %v83 = vld [vmem:[#allocation5 + $0x68] sm:$0xff]
    %v84 = vld [vmem:[#allocation5 + $0x70] sm:$0xff]
    %v85 = vld [vmem:[#allocation5 + $0x78] sm:$0xff]
    %v86 = vld [vmem:[#allocation8] sm:$0x1]
    %v87 = vlaneseq
    %v88 = vshrl.u32 %v87, 7
    %v89 = vsub.s32 0, %v88
    %v90 = vrot.slane %v86, %v89
    %91 = vmatprep.subr.mxu0 0.0
    %92 = vmatpush1.msra.mxu0 %v85
    %93 = vmatprep.subr.mxu0 0.0
    %94 = vmatpush1.msra.mxu0 %v84
    %95 = vmatprep.subr.mxu0 0.0
    %96 = vmatpush1.msra.mxu0 %v83
    %97 = vmatprep.subr.mxu0 0.0
    %98 = vmatpush1.msra.mxu0 %v82
    %99 = vmatprep.subr.mxu0 0.0
    %100 = vmatpush1.msra.mxu0 %v81
    %101 = vmatprep.subr.mxu0 0.0
    %102 = vmatpush1.msra.mxu0 %v80
    %103 = vmatprep.subr.mxu0 0.0
    %104 = vmatpush1.msra.mxu0 %v79
    %105 = vmatprep.subr.mxu0 0.0
    %106 = vmatpush1.msra.mxu0 %v78
    %107 = vmatprep.subr.mxu0 0.0
    %108 = vmatpush1.msra.mxu0 %v77
    %109 = vmatprep.subr.mxu0 0.0
    %110 = vmatpush1.msra.mxu0 %v76
    %111 = vmatprep.subr.mxu0 0.0
    %112 = vmatpush1.msra.mxu0 %v75
    %113 = vmatprep.subr.mxu0 0.0
    %114 = vmatpush1.msra.mxu0 %v74
    %115 = vmatprep.subr.mxu0 0.0
    %116 = vmatpush1.msra.mxu0 %v73
    %117 = vmatprep.subr.mxu0 0.0
    %118 = vmatpush1.msra.mxu0 %v72
    %119 = vmatprep.subr.mxu0 0.0
    %120 = vmatpush1.msra.mxu0 %v71
    %121 = vmatprep.subr.mxu0 0.0
    %122 = vmatpush1.msra.mxu0 %v70
    %123 = vmatprep.subr.mxu0 0.0
    %124 = vmatpush2.msra.mxu0 0.0
    %125 = vmatprep.subr.mxu0 0.0
    %126 = vmatpush2.msra.mxu0 0.0
    %127 = vmatprep.subr.mxu0 0.0
    %128 = vmatpush2.msra.mxu0 0.0
    %129 = vmatprep.subr.mxu0 0.0
    %130 = vmatpush2.msra.mxu0 0.0
    %131 = vmatprep.subr.mxu0 0.0
    %132 = vmatpush2.msra.mxu0 0.0
    %133 = vmatprep.subr.mxu0 0.0
    %134 = vmatpush2.msra.mxu0 0.0
    %135 = vmatprep.subr.mxu0 0.0
    %136 = vmatpush2.msra.mxu0 0.0
    %137 = vmatprep.subr.mxu0 0.0
    %138 = vmatpush2.msra.mxu0 0.0
    %139 = vmatprep.subr.mxu0 0.0
    %140 = vmatpush2.msra.mxu0 0.0
    %141 = vmatprep.subr.mxu0 0.0
    %142 = vmatpush2.msra.mxu0 0.0
    %143 = vmatprep.subr.mxu0 0.0
    %144 = vmatpush2.msra.mxu0 0.0
    %145 = vmatprep.subr.mxu0 0.0
    %146 = vmatpush2.msra.mxu0 0.0
    %147 = vmatprep.subr.mxu0 0.0
    %148 = vmatpush2.msra.mxu0 0.0
    %149 = vmatprep.subr.mxu0 0.0
    %150 = vmatpush2.msra.mxu0 0.0
    %151 = vmatprep.subr.mxu0 0.0
    %152 = vmatpush2.msra.mxu0 0.0
    %153 = vmatprep.subr.mxu0 0.0
    %154 = vmatpush2.msra.mxu0 0.0
    %155 = vmatprep.mubr.f32.mxu0 0.0
    %156 = vmatmul.mubr.f32.gmra.mxu0 %v69
    %v157 = vpop.f32.mrf.mxu0
    %v158 = vadd.f32 %v90, %v157
    %v159 = vpop.f32.mrf.mxu0
    %160 = vdwg.mxu0
    %v161 = vmax.f32 %v158, 0.0
    %v162 = vld [vmem:[#allocation8 + $0x2] sm:$0x1]
    %v163 = vlaneseq
    %v164 = vshrl.u32 %v163, 7
    %v165 = vsub.s32 0, %v164
    %v166 = vrot.slane %v162, %v165
    %v167 = vadd.f32 %v161, %v166
    %v168 = vld [vmem:[#allocation7] sm:$0xff]
    %v169 = vld [vmem:[#allocation7 + $0x8] sm:$0xff]
    %v170 = vld [vmem:[#allocation7 + $0x10] sm:$0xff]
    %v171 = vld [vmem:[#allocation7 + $0x18] sm:$0xff]
    %v172 = vld [vmem:[#allocation7 + $0x20] sm:$0xff]
    %v173 = vld [vmem:[#allocation7 + $0x28] sm:$0xff]
    %v174 = vld [vmem:[#allocation7 + $0x30] sm:$0xff]
    %v175 = vld [vmem:[#allocation7 + $0x38] sm:$0xff]
    %v176 = vld [vmem:[#allocation7 + $0x40] sm:$0xff]
    %v177 = vld [vmem:[#allocation7 + $0x48] sm:$0xff]
    %v178 = vld [vmem:[#allocation7 + $0x50] sm:$0xff]
    %v179 = vld [vmem:[#allocation7 + $0x58] sm:$0xff]
    %v180 = vld [vmem:[#allocation7 + $0x60] sm:$0xff]
    %v181 = vld [vmem:[#allocation7 + $0x68] sm:$0xff]
    %v182 = vld [vmem:[#allocation7 + $0x70] sm:$0xff]
    %v183 = vld [vmem:[#allocation7 + $0x78] sm:$0xff]
    %v184 = vld [vmem:[#allocation8 + $0x4] sm:$0x1]
    %v185 = vlaneseq
    %v186 = vshrl.u32 %v185, 7
    %v187 = vsub.s32 0, %v186
    %v188 = vrot.slane %v184, %v187
    %189 = vmatprep.subr.mxu0 0.0
    %190 = vmatpush1.msra.mxu0 %v183
    %191 = vmatprep.subr.mxu0 0.0
    %192 = vmatpush1.msra.mxu0 %v182
    %193 = vmatprep.subr.mxu0 0.0
    %194 = vmatpush1.msra.mxu0 %v181
    %195 = vmatprep.subr.mxu0 0.0
    %196 = vmatpush1.msra.mxu0 %v180
    %197 = vmatprep.subr.mxu0 0.0
    %198 = vmatpush1.msra.mxu0 %v179
    %199 = vmatprep.subr.mxu0 0.0
    %200 = vmatpush1.msra.mxu0 %v178
    %201 = vmatprep.subr.mxu0 0.0
    %202 = vmatpush1.msra.mxu0 %v177
    %203 = vmatprep.subr.mxu0 0.0
    %204 = vmatpush1.msra.mxu0 %v176
    %205 = vmatprep.subr.mxu0 0.0
    %206 = vmatpush1.msra.mxu0 %v175
    %207 = vmatprep.subr.mxu0 0.0
    %208 = vmatpush1.msra.mxu0 %v174
    %209 = vmatprep.subr.mxu0 0.0
    %210 = vmatpush1.msra.mxu0 %v173
    %211 = vmatprep.subr.mxu0 0.0
    %212 = vmatpush1.msra.mxu0 %v172
    %213 = vmatprep.subr.mxu0 0.0
    %214 = vmatpush1.msra.mxu0 %v171
    %215 = vmatprep.subr.mxu0 0.0
    %216 = vmatpush1.msra.mxu0 %v170
    %217 = vmatprep.subr.mxu0 0.0
    %218 = vmatpush1.msra.mxu0 %v169
    %219 = vmatprep.subr.mxu0 0.0
    %220 = vmatpush1.msra.mxu0 %v168
    %221 = vmatprep.subr.mxu0 0.0
    %222 = vmatpush2.msra.mxu0 0.0
    %223 = vmatprep.subr.mxu0 0.0
    %224 = vmatpush2.msra.mxu0 0.0
    %225 = vmatprep.subr.mxu0 0.0
    %226 = vmatpush2.msra.mxu0 0.0
    %227 = vmatprep.subr.mxu0 0.0
    %228 = vmatpush2.msra.mxu0 0.0
    %229 = vmatprep.subr.mxu0 0.0
    %230 = vmatpush2.msra.mxu0 0.0
    %231 = vmatprep.subr.mxu0 0.0
    %232 = vmatpush2.msra.mxu0 0.0
    %233 = vmatprep.subr.mxu0 0.0
    %234 = vmatpush2.msra.mxu0 0.0
    %235 = vmatprep.subr.mxu0 0.0
    %236 = vmatpush2.msra.mxu0 0.0
    %237 = vmatprep.subr.mxu0 0.0
    %238 = vmatpush2.msra.mxu0 0.0
    %239 = vmatprep.subr.mxu0 0.0
    %240 = vmatpush2.msra.mxu0 0.0
    %241 = vmatprep.subr.mxu0 0.0
    %242 = vmatpush2.msra.mxu0 0.0
    %243 = vmatprep.subr.mxu0 0.0
    %244 = vmatpush2.msra.mxu0 0.0
    %245 = vmatprep.subr.mxu0 0.0
    %246 = vmatpush2.msra.mxu0 0.0
    %247 = vmatprep.subr.mxu0 0.0
    %248 = vmatpush2.msra.mxu0 0.0
    %249 = vmatprep.subr.mxu0 0.0
    %250 = vmatpush2.msra.mxu0 0.0
    %251 = vmatprep.subr.mxu0 0.0
    %252 = vmatpush2.msra.mxu0 0.0
    %253 = vmatprep.mubr.f32.mxu0 0.0
    %254 = vmatmul.mubr.f32.gmra.mxu0 %v167
    %v255 = vpop.f32.mrf.mxu0
    %v256 = vadd.f32 %v188, %v255
    %v257 = vpop.f32.mrf.mxu0
    %258 = vdwg.mxu0
    %v259 = vmax.f32 %v256, 0.0
    %260 = vst [vmem:[#allocation10] sm:$0xff] %v259
    // Predicated region
    $region34: #{tpu_custom_call.1} parent=1 // pred_check
      _
    $region35: #{tpu_custom_call.1} parent=1 // pred_check_branch
      %262 = sbr.rel (0) target = $region37
    $region36: #{tpu_custom_call.1} parent=1 // pred_region
      %s264 = ssub.s32 128, 128
      %265 = vsyncadd [#allocation4], %s264
      %s267 = sshll.u32 [#allocation10], 4
      %s268 = int_to_ptr.vmem [resolvable:$true] %s267
      %270 = dma.vmem_to_hbm [thread:$0]  %s268, 128, %s4, [#allocation4]
    $region37: #{tpu_custom_call.1} parent=1 // pred_fallthru
      _
    // Predicated region
    $region38: #{tpu_custom_call.1} parent=1 // pred_check
      _
    $region39: #{tpu_custom_call.1} parent=1 // pred_check_branch
      %272 = sbr.rel (0) target = $region41
    $region40: #{tpu_custom_call.1} parent=1 // pred_region
      %273 = dma.done [#allocation4], 128
    $region41: #{tpu_custom_call.1} parent=1 // pred_fallthru
      _
    %274 = vsyncpa [#allocation3], 1
    %275 = vsyncpa [#allocation6], 1
    %276 = vsyncpa [#allocation9], 1
    %277 = vsyncpa [#allocation4], 1

</llo_original>
